<compile_context>
chip_gen: v7x
topology: tpu7x:2x2x1
jax: 0.10.0
libtpu: 0.0.40
codegen_flags: <defaults>
</compile_context>

<pallas_src>
import jax
import jax.numpy as jnp
from jax.experimental import pallas as pl
from jax.experimental.pallas import tpu as pltpu

F_e = 10
F_u = 10
F_xs = 10
F_xt = 2
F_IN = F_xs + F_xt + F_e + F_u  # 32


def _edge_mlp_kernel(h_ref, w1_ref, b1_ref, w2_ref, b2_ref, o_ref):
    # First Linear: bf16 MXU feed, f32 accumulation.
    z = jnp.dot(h_ref[...], w1_ref[...], preferred_element_type=jnp.float32)
    z = z + b1_ref[...]
    # LeakyReLU(negative_slope=0.1), fused: max(z, 0.1*z).
    z = jnp.maximum(z, 0.1 * z)
    # Second Linear: keep z in f32 (10x10 contraction is free in this
    # memory-bound kernel; tighter numerics vs. the f32 reference).
    o = jnp.dot(z, w2_ref[...], preferred_element_type=jnp.float32)
    o_ref[...] = (o + b2_ref[...]).astype(o_ref.dtype)


def _round_up(x, m):
    return ((x + m - 1) // m) * m


def edge_mlp_pallas(h_bf16, w1, b1, w2, b2, *, tile_e=8192,
                    out_dtype=jnp.float32):
    """Fused MLP over the pre-concatenated edge features h = [E, 32] (bf16)."""
    E = h_bf16.shape[0]
    assert h_bf16.shape[1] == F_IN

    # Tile selection: multiple of 16 (bf16 sublane packing).  If E fits in a
    # single tile, halve it so the grid has >=2 steps (feeds both v7x
    # TensorCores via the "parallel" axis); a 16-row minimum is kept.
    e16 = _round_up(max(E, 1), 16)
    if e16 <= tile_e:
        tile_e = max(16, _round_up((e16 + 1) // 2, 16))
    e_pad = _round_up(E, tile_e)
    pad = e_pad - E
    if pad:
        h_bf16 = jnp.pad(h_bf16, ((0, pad), (0, 0)))

    # Resident (single-block) weights: W1 in bf16 to match the MXU feed,
    # W2/biases in f32 (tiny, and the second matmul runs in f32).
    w1_b = w1.astype(jnp.bfloat16)

    grid = (e_pad // tile_e,)
    edge_spec = lambda f: pl.BlockSpec((tile_e, f), lambda i: (i, 0))
    resident = lambda a: pl.BlockSpec(a.shape, lambda i: (0, 0))

    out_bytes = jnp.dtype(out_dtype).itemsize
    flops = 2 * e_pad * (F_IN * F_e + F_e * F_e)
    bytes_accessed = (
        e_pad * F_IN * 2                      # bf16 edge-feature reads
        + e_pad * F_e * out_bytes             # output write
        + F_IN * F_e * 2 + F_e * F_e * 4      # weights
        + 2 * F_e * 4)                        # biases

    out = pl.pallas_call(
        _edge_mlp_kernel,
        out_shape=jax.ShapeDtypeStruct((e_pad, F_e), out_dtype),
        grid=grid,
        in_specs=[
            edge_spec(F_IN),
            resident(w1_b), resident(b1), resident(w2), resident(b2),
        ],
        out_specs=edge_spec(F_e),
        compiler_params=pltpu.CompilerParams(
            dimension_semantics=("parallel",),
            vmem_limit_bytes=40 * 1024 * 1024),
        cost_estimate=pl.CostEstimate(
            flops=flops, transcendentals=0, bytes_accessed=bytes_accessed),
    )(h_bf16, w1_b, b1, w2, b2)
    return out[:E]


def edge_model_forward(params, x_s, x_t, edge_index, edge_attr, u, batch_e,
                       *, tile_e=8192):
    """Pallas-backed equivalent of EdgeModel.forward."""
    src, tgt = edge_index[0], edge_index[1]
    # Single producer chain (gather -> concat -> bf16 cast); the pad inside
    # edge_mlp_pallas extends the same chain, so XLA materializes one
    # [e_pad, 32] bf16 array read by the kernel.
    h = jnp.concatenate(
        [x_s[src], x_t[tgt], edge_attr, u[batch_e]], axis=-1
    ).astype(jnp.bfloat16)
    w1, b1, w2, b2 = params
    return edge_mlp_pallas(h, w1, b1, w2, b2, tile_e=tile_e)


def init_params(key):
    """Deterministic init mimicking torch.nn.Linear default U(-1/sqrt(fan_in), +)."""
    k1, k2, k3, k4 = jax.random.split(key, 4)
    bound1 = 1.0 / (F_IN ** 0.5)
    bound2 = 1.0 / (F_e ** 0.5)
    w1 = jax.random.uniform(k1, (F_IN, F_e), jnp.float32, -bound1, bound1)
    b1 = jax.random.uniform(k2, (1, F_e), jnp.float32, -bound1, bound1)
    w2 = jax.random.uniform(k3, (F_e, F_e), jnp.float32, -bound2, bound2)
    b2 = jax.random.uniform(k4, (1, F_e), jnp.float32, -bound2, bound2)
    return (w1, b1, w2, b2)


if __name__ == "__main__":
    key = jax.random.PRNGKey(0)
    kp, ks, kt, ke, ku, ki, kb = jax.random.split(key, 7)

    # Small synthetic graph: 6 source nodes, 5 target nodes, 8 edges, 2 graphs.
    N_s, N_t, E, B = 6, 5, 8, 2
    x_s = jax.random.normal(ks, (N_s, F_xs), jnp.float32)
    x_t = jax.random.normal(kt, (N_t, F_xt), jnp.float32)
    edge_attr = jax.random.normal(ke, (E, F_e), jnp.float32)
    u = jax.random.normal(ku, (B, F_u), jnp.float32)
    src = jax.random.randint(ki, (E,), 0, N_s, jnp.int32)
    tgt = jax.random.randint(jax.random.fold_in(ki, 1), (E,), 0, N_t, jnp.int32)
    edge_index = jnp.stack([src, tgt], axis=0)  # [2, E]
    batch_e = jax.random.randint(kb, (E,), 0, B, jnp.int32)

    params = init_params(kp)

    out = edge_model_forward(params, x_s, x_t, edge_index, edge_attr, u, batch_e)
    out = jax.block_until_ready(out)

    # Pure-JAX f32 reference (same semantics as the torch module).
    h_ref = jnp.concatenate(
        [x_s[edge_index[0]], x_t[edge_index[1]], edge_attr, u[batch_e]], axis=-1
    )
    w1, b1, w2, b2 = params
    z_ref = h_ref @ w1 + b1
    z_ref = jnp.where(z_ref > 0, z_ref, 0.1 * z_ref)
    ref = z_ref @ w2 + b2

    assert out.shape == (E, F_e)
    # Tolerance accounts for the bf16 MXU feed of h/W1 (f32 accumulation,
    # f32 second matmul).
    assert jnp.allclose(out, ref, atol=3e-2, rtol=3e-2), (
        float(jnp.max(jnp.abs(out - ref))))
    print("KERNEL_OK")
</pallas_src>

<mosaic_0001>
module attributes {stable_mosaic.version = 11 : i64} {
  func.func @_edge_mlp_kernel(%arg0: i32, %arg1: memref<16x32xbf16, #tpu.memory_space<vmem>>, %arg2: memref<32x10xbf16, #tpu.memory_space<vmem>>, %arg3: memref<1x10xf32, #tpu.memory_space<vmem>>, %arg4: memref<10x10xf32, #tpu.memory_space<vmem>>, %arg5: memref<1x10xf32, #tpu.memory_space<vmem>>, %arg6: memref<16x10xf32, #tpu.memory_space<vmem>>) attributes {dimension_semantics = [#tpu.dimension_semantics<parallel>], iteration_bounds = array<i64: 1>, scalar_prefetch = 0 : i64, scratch_operands = 0 : i64, tpu.core_type = #tpu.core_type<tc>, window_params = [{transform_indices = @transform_0, window_bounds = array<i64: 16, 32>}, {pipeline_mode = #tpu.pipeline_mode<synchronous>, transform_indices = @transform_1, window_bounds = array<i64: 32, 10>}, {pipeline_mode = #tpu.pipeline_mode<synchronous>, transform_indices = @transform_2, window_bounds = array<i64: 1, 10>}, {pipeline_mode = #tpu.pipeline_mode<synchronous>, transform_indices = @transform_3, window_bounds = array<i64: 10, 10>}, {pipeline_mode = #tpu.pipeline_mode<synchronous>, transform_indices = @transform_4, window_bounds = array<i64: 1, 10>}, {transform_indices = @transform_5, window_bounds = array<i64: 16, 10>}]} {
    %c0 = arith.constant 0 : index
    %c0_0 = arith.constant 0 : index
    %0 = vector.load %arg1[%c0, %c0_0] : memref<16x32xbf16, #tpu.memory_space<vmem>>, vector<16x32xbf16>
    %c0_1 = arith.constant 0 : index
    %c0_2 = arith.constant 0 : index
    %1 = vector.load %arg2[%c0_1, %c0_2] : memref<32x10xbf16, #tpu.memory_space<vmem>>, vector<32x10xbf16>
    %cst = arith.constant dense<0.000000e+00> : vector<16x10xf32>
    %2 = tpu.matmul %0, %1, %cst {dimension_numbers = #tpu.dot_dimension_numbers<[1], [0], [0], [1], [0, 0, 1, 1], [], []>} : vector<16x32xbf16>, vector<32x10xbf16>, vector<16x10xf32> -> vector<16x10xf32>
    %c0_3 = arith.constant 0 : index
    %c0_4 = arith.constant 0 : index
    %3 = vector.load %arg3[%c0_3, %c0_4] : memref<1x10xf32, #tpu.memory_space<vmem>>, vector<1x10xf32>
    %4 = vector.broadcast %3 : vector<1x10xf32> to vector<16x10xf32>
    %5 = arith.addf %2, %4 : vector<16x10xf32>
    %cst_5 = arith.constant 1.000000e-01 : f32
    %6 = vector.broadcast %cst_5 : f32 to vector<16x10xf32>
    %7 = arith.mulf %6, %5 : vector<16x10xf32>
    %8 = arith.maximumf %5, %7 : vector<16x10xf32>
    %c0_6 = arith.constant 0 : index
    %c0_7 = arith.constant 0 : index
    %9 = vector.load %arg4[%c0_6, %c0_7] : memref<10x10xf32, #tpu.memory_space<vmem>>, vector<10x10xf32>
    %cst_8 = arith.constant dense<0.000000e+00> : vector<16x10xf32>
    %10 = tpu.matmul %8, %9, %cst_8 {dimension_numbers = #tpu.dot_dimension_numbers<[1], [0], [0], [1], [0, 0, 1, 1], [], []>} : vector<16x10xf32>, vector<10x10xf32>, vector<16x10xf32> -> vector<16x10xf32>
    %c0_9 = arith.constant 0 : index
    %c0_10 = arith.constant 0 : index
    %11 = vector.load %arg5[%c0_9, %c0_10] : memref<1x10xf32, #tpu.memory_space<vmem>>, vector<1x10xf32>
    %12 = vector.broadcast %11 : vector<1x10xf32> to vector<16x10xf32>
    %13 = arith.addf %10, %12 : vector<16x10xf32>
    %c0_11 = arith.constant 0 : index
    %c0_12 = arith.constant 0 : index
    %14 = vector.load %arg6[%c0_11, %c0_12] : memref<16x10xf32, #tpu.memory_space<vmem>>, vector<16x10xf32>
    tpu.vector_store %arg6[%c0_11, %c0_12], %13 {strides = array<i32>} : memref<16x10xf32, #tpu.memory_space<vmem>>, vector<16x10xf32>,
    return
  }
  func.func @transform_0(%arg0: i32) -> (i32, i32) {
    %c0_i32 = arith.constant 0 : i32
    %c0_i32_0 = arith.constant 0 : i32
    return %arg0, %c0_i32 : i32, i32
  }
  func.func @transform_1(%arg0: i32) -> (i32, i32) {
    %c0_i32 = arith.constant 0 : i32
    %c0_i32_0 = arith.constant 0 : i32
    %c0_i32_1 = arith.constant 0 : i32
    return %c0_i32, %c0_i32_0 : i32, i32
  }
  func.func @transform_2(%arg0: i32) -> (i32, i32) {
    %c0_i32 = arith.constant 0 : i32
    %c0_i32_0 = arith.constant 0 : i32
    %c0_i32_1 = arith.constant 0 : i32
    return %c0_i32, %c0_i32_0 : i32, i32
  }
  func.func @transform_3(%arg0: i32) -> (i32, i32) {
    %c0_i32 = arith.constant 0 : i32
    %c0_i32_0 = arith.constant 0 : i32
    %c0_i32_1 = arith.constant 0 : i32
    return %c0_i32, %c0_i32_0 : i32, i32
  }
  func.func @transform_4(%arg0: i32) -> (i32, i32) {
    %c0_i32 = arith.constant 0 : i32
    %c0_i32_0 = arith.constant 0 : i32
    %c0_i32_1 = arith.constant 0 : i32
    return %c0_i32, %c0_i32_0 : i32, i32
  }
  func.func @transform_5(%arg0: i32) -> (i32, i32) {
    %c0_i32 = arith.constant 0 : i32
    %c0_i32_0 = arith.constant 0 : i32
    return %arg0, %c0_i32 : i32, i32
  }
}

</mosaic_0001>

<llo_original>
// kernel: tpu_custom_call.1
$region0: #{tpu_custom_call.1}
  #allocation0 [shape = 'u32[]', space=smem, size = 0x4, offset = 0x4, fixed_abs, tag = 'smem constant byte address 0x4 - core index']
  #allocation1 [shape = 'u32[144,128]{1,0:T(1,128)}', space=vmem, size = 0x12000, scoped, tag = 'internal scratch']
  %s0 = inlined_call_operand.vmem [shape: bf16[16,32], index: 0, kind: input, shape index: {}]
  %s1 = inlined_call_operand.vmem [shape: bf16[32,10], index: 1, kind: input, shape index: {}]
  %s2 = inlined_call_operand.vmem [shape: f32[1,10], index: 2, kind: input, shape index: {}]
  %s3 = inlined_call_operand.vmem [shape: f32[10,10], index: 3, kind: input, shape index: {}]
  %s4 = inlined_call_operand.vmem [shape: f32[1,10], index: 4, kind: input, shape index: {}]
  %s5 = inlined_call_operand.hbm [shape: f32[16,10], index: 5, kind: output, shape index: {}]
  %s6 = sld [smem:[#allocation0]]
  $region30: #{tpu_custom_call.1} parent=0
    _
  %s8 = ssub.s32 1, %s6
  %s9 = scalar_select 0, %s8, %s6
  $region1: #{tpu_custom_call.1} parent=0
    #allocation2 [shape = 'u8[8192]{0}', space=vmem, size = 0x2000, scoped, tag = 'output window, operand 0, single buffered']
    #allocation3 [shape = 's32[1]{0}', space=sflag, size = 0x4, scoped, tag = 'scoped memory for tpu_custom_call.1']
    %10 = vsyncpa [#allocation3], 0
    // Predicated region
    $region2: #{tpu_custom_call.1} parent=1 // pred_check
      _
    $region3: #{tpu_custom_call.1} parent=1 // pred_check_branch
      %12 = sbr.rel (0) target = $region5
    $region4: #{tpu_custom_call.1} parent=1 // pred_region
      _
    $region5: #{tpu_custom_call.1} parent=1 // pred_fallthru
      _
    // Predicated region
    $region6: #{tpu_custom_call.1} parent=1 // pred_check
      _
    $region7: #{tpu_custom_call.1} parent=1 // pred_check_branch
      %14 = sbr.rel (0) target = $region9
    $region8: #{tpu_custom_call.1} parent=1 // pred_region
      _
    $region9: #{tpu_custom_call.1} parent=1 // pred_fallthru
      _
    // Predicated region
    $region10: #{tpu_custom_call.1} parent=1 // pred_check
      _
    $region11: #{tpu_custom_call.1} parent=1 // pred_check_branch
      %16 = sbr.rel (0) target = $region13
    $region12: #{tpu_custom_call.1} parent=1 // pred_region
      _
    $region13: #{tpu_custom_call.1} parent=1 // pred_fallthru
      _
    // Predicated region
    $region14: #{tpu_custom_call.1} parent=1 // pred_check
      _
    $region15: #{tpu_custom_call.1} parent=1 // pred_check_branch
      %18 = sbr.rel (0) target = $region17
    $region16: #{tpu_custom_call.1} parent=1 // pred_region
      _
    $region17: #{tpu_custom_call.1} parent=1 // pred_fallthru
      _
    // Predicated region
    $region18: #{tpu_custom_call.1} parent=1 // pred_check
      _
    $region19: #{tpu_custom_call.1} parent=1 // pred_check_branch
      %20 = sbr.rel (0) target = $region21
    $region20: #{tpu_custom_call.1} parent=1 // pred_region
      _
    $region21: #{tpu_custom_call.1} parent=1 // pred_fallthru
      _
    %v22 = vld [vmem:[%s0] sm:$0xf]
    %v23 = vld [vmem:[%s0 + $0x4] sm:$0xf]
    %v24 = vld [vmem:[%s1] sm:$0xf]
    %v25 = vld [vmem:[%s1 + $0x4] sm:$0xf]
    %v26 = vld [vmem:[%s1 + $0x8] sm:$0xf]
    %v27 = vld [vmem:[%s1 + $0xc] sm:$0xf]
    %v28 = vld [vmem:[%s2] sm:$0x1]
    %v30 = vlaneseq
    %v31 = vshrl.u32 %v30, 7
    %v32 = vsub.s32 0, %v31
    %v33 = vrot.slane %v28, %v32
    %v37 = vunpack.c.l.b16 %v22
    %v38 = vunpack.c.l.b16 %v23
    %v39 = vpack.c.b16 %v38, %v37
    %v44 = vunpack.c.l.b16 %v24
    %v45 = vunpack.c.l.b16 %v25
    %v46 = vunpack.c.l.b16 %v26
    %v47 = vunpack.c.l.b16 %v27
    %v48 = vpack.c.b16 %v45, %v44
    %v49 = vpack.c.b16 %v47, %v46
    %vm52 = vcmask 261120
    %v54 = vsel %vm52, %v39, 0
    %56 = vmatprep.subr.bf16.mxu0 0
    %57 = vmatpush1.bf16.msra.mxu0 %v48
    %58 = vmatprep.subr.bf16.mxu0 0
    %59 = vmatpush1.bf16.msra.mxu0 %v49
    %60 = vmatprep.subr.bf16.mxu0 0
    %61 = vmatpush1.bf16.msra.mxu0 0
    %62 = vmatprep.subr.bf16.mxu0 0
    %63 = vmatpush1.bf16.msra.mxu0 0
    %64 = vmatprep.subr.bf16.mxu0 0
    %65 = vmatpush1.bf16.msra.mxu0 0
    %66 = vmatprep.subr.bf16.mxu0 0
    %67 = vmatpush1.bf16.msra.mxu0 0
    %68 = vmatprep.subr.bf16.mxu0 0
    %69 = vmatpush1.bf16.msra.mxu0 0
    %70 = vmatprep.subr.bf16.mxu0 0
    %71 = vmatpush1.bf16.msra.mxu0 0
    %72 = vmatprep.subr.bf16.mxu0 0
    %73 = vmatpush1.bf16.msra.mxu0 0
    %74 = vmatprep.subr.bf16.mxu0 0
    %75 = vmatpush1.bf16.msra.mxu0 0
    %76 = vmatprep.subr.bf16.mxu0 0
    %77 = vmatpush1.bf16.msra.mxu0 0
    %78 = vmatprep.subr.bf16.mxu0 0
    %79 = vmatpush1.bf16.msra.mxu0 0
    %80 = vmatprep.subr.bf16.mxu0 0
    %81 = vmatpush1.bf16.msra.mxu0 0
    %82 = vmatprep.subr.bf16.mxu0 0
    %83 = vmatpush1.bf16.msra.mxu0 0
    %84 = vmatprep.subr.bf16.mxu0 0
    %85 = vmatpush1.bf16.msra.mxu0 0
    %86 = vmatprep.subr.bf16.mxu0 0
    %87 = vmatpush1.bf16.msra.mxu0 0
    %88 = vmatprep.mubr.bf16.mxu0 0
    %89 = vmatmul.mubr.bf16.gmra.mrb[0].mxu0 %v54
    %v90 = vpop.f32.mrb[0].mxu0
    %v91 = vadd.f32 %v33, %v90
    %v92 = vpop.f32.mrb[0].mxu0
    %v93 = vpop.f32.mrb[0].mxu0
    %v94 = vadd.f32 %v33, %v93
    %v95 = vpop.f32.mrb[0].mxu0
    %96 = vdwg.mxu0
    %v97 = vmul.f32 %v91, 0.1
    %v98 = vmul.f32 %v94, 0.1
    %v99 = vmax.f32 %v91, %v97
    %v100 = vmax.f32 %v94, %v98
    %v101 = vld [vmem:[%s3] sm:$0xff]
    %v102 = vld [vmem:[%s3 + $0x8] sm:$0x3]
    %v103 = vld [vmem:[%s4] sm:$0x1]
    %v105 = vlaneseq
    %v106 = vshrl.u32 %v105, 7
    %v107 = vsub.s32 0, %v106
    %v108 = vrot.slane %v103, %v107
    %vm110 = vcmask 80896
    %v112 = vsel %vm110, %v99, 0
    %v115 = vsel %vm110, %v100, 0
    %vm117 = vcmask 1041408
    %v119 = vsel %vm117, %v102, 0
    %121 = vmatprep.subr.mxu0 0.0
    %122 = vmatpush1.msra.mxu0 %v101
    %123 = vmatprep.subr.mxu0 0.0
    %124 = vmatpush1.msra.mxu0 %v119
    %125 = vmatprep.subr.mxu0 0.0
    %126 = vmatpush1.msra.mxu0 0.0
    %127 = vmatprep.subr.mxu0 0.0
    %128 = vmatpush1.msra.mxu0 0.0
    %129 = vmatprep.subr.mxu0 0.0
    %130 = vmatpush1.msra.mxu0 0.0
    %131 = vmatprep.subr.mxu0 0.0
    %132 = vmatpush1.msra.mxu0 0.0
    %133 = vmatprep.subr.mxu0 0.0
    %134 = vmatpush1.msra.mxu0 0.0
    %135 = vmatprep.subr.mxu0 0.0
    %136 = vmatpush1.msra.mxu0 0.0
    %137 = vmatprep.subr.mxu0 0.0
    %138 = vmatpush1.msra.mxu0 0.0
    %139 = vmatprep.subr.mxu0 0.0
    %140 = vmatpush1.msra.mxu0 0.0
    %141 = vmatprep.subr.mxu0 0.0
    %142 = vmatpush1.msra.mxu0 0.0
    %143 = vmatprep.subr.mxu0 0.0
    %144 = vmatpush1.msra.mxu0 0.0
    %145 = vmatprep.subr.mxu0 0.0
    %146 = vmatpush1.msra.mxu0 0.0
    %147 = vmatprep.subr.mxu0 0.0
    %148 = vmatpush1.msra.mxu0 0.0
    %149 = vmatprep.subr.mxu0 0.0
    %150 = vmatpush1.msra.mxu0 0.0
    %151 = vmatprep.subr.mxu0 0.0
    %152 = vmatpush1.msra.mxu0 0.0
    %153 = vmatprep.subr.mxu0 0.0
    %154 = vmatpush1.msra.mxu0 0.0
    %155 = vmatprep.subr.mxu0 0.0
    %156 = vmatpush1.msra.mxu0 0.0
    %157 = vmatprep.subr.mxu0 0.0
    %158 = vmatpush1.msra.mxu0 0.0
    %159 = vmatprep.subr.mxu0 0.0
    %160 = vmatpush1.msra.mxu0 0.0
    %161 = vmatprep.subr.mxu0 0.0
    %162 = vmatpush1.msra.mxu0 0.0
    %163 = vmatprep.subr.mxu0 0.0
    %164 = vmatpush1.msra.mxu0 0.0
    %165 = vmatprep.subr.mxu0 0.0
    %166 = vmatpush1.msra.mxu0 0.0
    %167 = vmatprep.subr.mxu0 0.0
    %168 = vmatpush1.msra.mxu0 0.0
    %169 = vmatprep.subr.mxu0 0.0
    %170 = vmatpush1.msra.mxu0 0.0
    %171 = vmatprep.subr.mxu0 0.0
    %172 = vmatpush1.msra.mxu0 0.0
    %173 = vmatprep.subr.mxu0 0.0
    %174 = vmatpush1.msra.mxu0 0.0
    %175 = vmatprep.subr.mxu0 0.0
    %176 = vmatpush1.msra.mxu0 0.0
    %177 = vmatprep.subr.mxu0 0.0
    %178 = vmatpush1.msra.mxu0 0.0
    %179 = vmatprep.subr.mxu0 0.0
    %180 = vmatpush1.msra.mxu0 0.0
    %181 = vmatprep.subr.mxu0 0.0
    %182 = vmatpush1.msra.mxu0 0.0
    %183 = vmatprep.subr.mxu0 0.0
    %184 = vmatpush1.msra.mxu0 0.0
    %185 = vmatprep.mubr.f32.mxu0 0.0
    %186 = vmatmul.mubr.f32.gmra.mrb[0].mxu0 %v112
    %v187 = vpop.f32.mrb[0].mxu0
    %v188 = vadd.f32 %v108, %v187
    %v189 = vpop.f32.mrb[0].mxu0
    %190 = vmatprep.mubr.f32.mxu0 0.0
    %191 = vmatmul.mubr.f32.gmra.mrb[0].mxu0 %v115
    %v192 = vpop.f32.mrb[0].mxu0
    %v193 = vadd.f32 %v108, %v192
    %v194 = vpop.f32.mrb[0].mxu0
    %195 = vdwg.mxu0
    %196 = vst.msk [vmem:[#allocation2] sm:$0xff] %vm110, %v188
    %197 = vst.msk [vmem:[#allocation2 + $0x8] sm:$0xff] %vm110, %v193
    // Predicated region
    $region22: #{tpu_custom_call.1} parent=1 // pred_check
      _
    $region23: #{tpu_custom_call.1} parent=1 // pred_check_branch
      %199 = sbr.rel (0) target = $region25
    $region24: #{tpu_custom_call.1} parent=1 // pred_region
      %s201 = ssub.s32 256, 256
      %202 = vsyncadd [#allocation3], %s201
      %s203 = sshll.u32 [#allocation2], 4
      %s204 = int_to_ptr.vmem [resolvable:$true] %s203
      %209 = dma.vmem_to_hbm [thread:$0]  %s204, 256, %s5, [#allocation3], 128, 128, 8
    $region25: #{tpu_custom_call.1} parent=1 // pred_fallthru
      _
    // Predicated region
    $region26: #{tpu_custom_call.1} parent=1 // pred_check
      _
    $region27: #{tpu_custom_call.1} parent=1 // pred_check_branch
      %211 = sbr.rel (0) target = $region29
    $region28: #{tpu_custom_call.1} parent=1 // pred_region
      %212 = dma.done [#allocation3], 256
    $region29: #{tpu_custom_call.1} parent=1 // pred_fallthru
      _
    %213 = vsyncpa [#allocation3], 1

</llo_original>
